<compile_context>
chip_gen: v6e
topology: v6e:2x2x1
jax: 0.10.0
libtpu: 0.0.40
codegen_flags: <defaults>
</compile_context>

<pallas_src>
import jax
import jax.numpy as jnp
from jax.experimental import pallas as pl
from jax.experimental.pallas import tpu as pltpu

# Small shapes consistent with the module.
BATCH = 2           # batch size
N_CH = 4            # n_channel
IMG = 16            # image_size
PATCH = 4           # n_patch (kernel = stride = PATCH)
N_DIM = 32          # n_dim (embedding dim)

HP = IMG // PATCH                  # patches per side = 4
N_PATCHES = HP * HP                # 16
PATCH_DIM = N_CH * PATCH * PATCH   # 64
SEQ = N_PATCHES + 1                # 17 (class token appended at the end)


def patch_embed_kernel(patches_ref, w_ref, b_ref, cls_ref, pos_ref, o_ref):
    """patches: (B*N, PD); w: (D, PD); b, cls: (1, D); pos: (N+1, D); out: (B, N+1, D)."""
    # One MXU matmul for the whole batch (batch folded into M). The RHS is
    # contracted on its last dim ("NT" form), so the PyTorch (D, C*P*P) weight
    # layout is consumed directly — no wrapper-side transpose.
    emb = jax.lax.dot_general(
        patches_ref[...], w_ref[...],
        dimension_numbers=(((1,), (1,)), ((), ())),
        precision=jax.lax.Precision.HIGHEST,
        preferred_element_type=jnp.float32)                      # (B*N, D)

    # Fold the conv bias into the patch-row position embeddings (done once,
    # (N,D) instead of a (B*N,D) broadcast add on the matmul result).
    pos_pb = pos_ref[:N_PATCHES, :] + b_ref[...]                 # (N, D)
    cls_row = cls_ref[...] + pos_ref[N_PATCHES:, :]              # (1, D)

    # One sublane-aligned store for all patch rows (split 32 -> (2,16) rows, 16 is
    # a multiple of 8), plus one store for the appended class-token row.
    o_ref[:, :N_PATCHES, :] = emb.reshape(BATCH, N_PATCHES, N_DIM) + pos_pb
    o_ref[:, N_PATCHES:, :] = jnp.broadcast_to(
        cls_row.reshape(1, 1, N_DIM), (BATCH, 1, N_DIM))


def patch_embedder(x, conv_w, conv_b, class_token, pos_embedding):
    """x: (B, C, H, W) f32.  conv_w: (D, C, P, P) (PyTorch Conv2d layout).  conv_b: (D,).
    class_token: (1, 1, D).  pos_embedding: (N+1, D).  Returns (B, N+1, D)."""
    B, C, H, W = x.shape
    hp, wp = H // PATCH, W // PATCH
    n = hp * wp

    # im2col (layout-only; identical math to Conv2d with kernel=stride=PATCH).
    # Feature order (c, ph, pw) matches conv_w.reshape(D, C*P*P); patch order is
    # row-major over (hp, wp), matching embs.flatten(2).transpose(-1, -2).
    # allow_input_fusion below lets XLA fuse these layout ops into the kernel input.
    patches = x.reshape(B, C, hp, PATCH, wp, PATCH)
    patches = patches.transpose(0, 2, 4, 1, 3, 5).reshape(B * n, C * PATCH * PATCH)
    w = conv_w.reshape(N_DIM, C * PATCH * PATCH)    # contiguous reshape (free); NOT transposed
    b = conv_b.reshape(1, N_DIM)
    cls = class_token.reshape(1, N_DIM)
    # TODO(synk): the use_cnn_embedding=False path depends on the unshown
    # slice_image_to_patches() flattening order; only the Conv2d path is implemented.

    flops = 2 * (B * n) * (C * PATCH * PATCH) * N_DIM
    bytes_accessed = 4 * (patches.size + w.size + b.size + cls.size
                          + pos_embedding.size + B * (n + 1) * N_DIM)
    vmem_spec = pl.BlockSpec(memory_space=pltpu.MemorySpace.VMEM)

    return pl.pallas_call(
        patch_embed_kernel,
        out_shape=jax.ShapeDtypeStruct((B, n + 1, N_DIM), jnp.float32),
        # No grid: one invocation, every operand single-shot resident in VMEM.
        in_specs=[vmem_spec] * 5,
        out_specs=vmem_spec,
        compiler_params=pltpu.CompilerParams(allow_input_fusion=[True] * 5),
        cost_estimate=pl.CostEstimate(flops=flops, transcendentals=0,
                                      bytes_accessed=bytes_accessed),
    )(patches, w, b, cls, pos_embedding)


def reference(x, conv_w, conv_b, class_token, pos_embedding):
    """Pure-JAX mirror of the PyTorch module (use_cnn_embedding=True)."""
    B = x.shape[0]
    embs = jax.lax.conv_general_dilated(
        x, conv_w, window_strides=(PATCH, PATCH), padding="VALID",
        dimension_numbers=("NCHW", "OIHW", "NCHW"),
        precision=jax.lax.Precision.HIGHEST)
    embs = embs + conv_b.reshape(1, N_DIM, 1, 1)
    embs = embs.reshape(B, N_DIM, -1).transpose(0, 2, 1)      # flatten(2).transpose(-1,-2)
    cls = jnp.broadcast_to(class_token.reshape(1, 1, N_DIM), (B, 1, N_DIM))
    embs = jnp.concatenate([embs, cls], axis=1)               # class token appended
    return embs + pos_embedding


if __name__ == "__main__":
    key = jax.random.PRNGKey(0)
    kx, kw, kb, kc, kp = jax.random.split(key, 5)
    x = jax.random.normal(kx, (BATCH, N_CH, IMG, IMG), jnp.float32)
    conv_w = 0.02 * jax.random.normal(kw, (N_DIM, N_CH, PATCH, PATCH), jnp.float32)
    conv_b = 0.02 * jax.random.normal(kb, (N_DIM,), jnp.float32)
    class_token = jax.random.normal(kc, (1, 1, N_DIM), jnp.float32)    # torch.randn init
    pos_embedding = jax.random.normal(kp, (SEQ, N_DIM), jnp.float32)   # torch.randn init

    out = jax.block_until_ready(
        patch_embedder(x, conv_w, conv_b, class_token, pos_embedding))
    ref = reference(x, conv_w, conv_b, class_token, pos_embedding)

    assert out.shape == (BATCH, SEQ, N_DIM), out.shape
    max_err = float(jnp.max(jnp.abs(out - ref)))
    assert jnp.allclose(out, ref, atol=1e-4, rtol=1e-4), max_err
    print("KERNEL_OK")
</pallas_src>

<mosaic_0001>
module attributes {stable_mosaic.version = 11 : i64} {
  func.func @patch_embed_kernel(%arg0: memref<32x64xf32, #tpu.memory_space<vmem>>, %arg1: memref<32x64xf32, #tpu.memory_space<vmem>>, %arg2: memref<1x32xf32, #tpu.memory_space<vmem>>, %arg3: memref<1x32xf32, #tpu.memory_space<vmem>>, %arg4: memref<17x32xf32, #tpu.memory_space<vmem>>, %arg5: memref<2x17x32xf32, #tpu.memory_space<vmem>>) attributes {dimension_semantics = [], scalar_prefetch = 0 : i64, scratch_operands = 0 : i64, tpu.core_type = #tpu.core_type<tc>} {
    %c0 = arith.constant 0 : index
    %c0_0 = arith.constant 0 : index
    %0 = vector.load %arg0[%c0, %c0_0] : memref<32x64xf32, #tpu.memory_space<vmem>>, vector<32x64xf32>
    %c0_1 = arith.constant 0 : index
    %c0_2 = arith.constant 0 : index
    %1 = vector.load %arg1[%c0_1, %c0_2] : memref<32x64xf32, #tpu.memory_space<vmem>>, vector<32x64xf32>
    %cst = arith.constant dense<0.000000e+00> : vector<32x32xf32>
    %2 = tpu.matmul %0, %1, %cst {dimension_numbers = #tpu.dot_dimension_numbers<[1], [1], [0], [0], [0, 0, 1, 0], [], []>, precision = #tpu.contract_precision<fp32>} : vector<32x64xf32>, vector<32x64xf32>, vector<32x32xf32> -> vector<32x32xf32>
    %c0_3 = arith.constant 0 : index
    %c0_4 = arith.constant 0 : index
    %3 = vector.load %arg4[%c0_3, %c0_4] : memref<17x32xf32, #tpu.memory_space<vmem>>, vector<16x32xf32>
    %c0_5 = arith.constant 0 : index
    %c0_6 = arith.constant 0 : index
    %4 = vector.load %arg2[%c0_5, %c0_6] : memref<1x32xf32, #tpu.memory_space<vmem>>, vector<1x32xf32>
    %5 = vector.broadcast %4 : vector<1x32xf32> to vector<16x32xf32>
    %6 = arith.addf %3, %5 : vector<16x32xf32>
    %c0_7 = arith.constant 0 : index
    %c0_8 = arith.constant 0 : index
    %7 = vector.load %arg3[%c0_7, %c0_8] : memref<1x32xf32, #tpu.memory_space<vmem>>, vector<1x32xf32>
    %c16 = arith.constant 16 : index
    %c0_9 = arith.constant 0 : index
    %8 = vector.load %arg4[%c16, %c0_9] : memref<17x32xf32, #tpu.memory_space<vmem>>, vector<1x32xf32>
    %9 = arith.addf %7, %8 : vector<1x32xf32>
    %10 = vector.shape_cast %2 : vector<32x32xf32> to vector<2x16x32xf32>
    %11 = vector.shape_cast %6 : vector<16x32xf32> to vector<1x16x32xf32>
    %12 = vector.broadcast %11 : vector<1x16x32xf32> to vector<2x16x32xf32>
    %13 = arith.addf %10, %12 : vector<2x16x32xf32>
    %c0_10 = arith.constant 0 : index
    %c0_11 = arith.constant 0 : index
    %c0_12 = arith.constant 0 : index
    %14 = vector.load %arg5[%c0_10, %c0_11, %c0_12] : memref<2x17x32xf32, #tpu.memory_space<vmem>>, vector<2x16x32xf32>
    tpu.vector_store %arg5[%c0_10, %c0_11, %c0_12], %13 {strides = array<i32>} : memref<2x17x32xf32, #tpu.memory_space<vmem>>, vector<2x16x32xf32>,
    %15 = vector.shape_cast %9 : vector<1x32xf32> to vector<1x1x32xf32>
    %16 = vector.shape_cast %15 : vector<1x1x32xf32> to vector<1x1x32xf32>
    %17 = vector.broadcast %16 : vector<1x1x32xf32> to vector<2x1x32xf32>
    %c0_13 = arith.constant 0 : index
    %c16_14 = arith.constant 16 : index
    %c0_15 = arith.constant 0 : index
    %18 = vector.load %arg5[%c0_13, %c16_14, %c0_15] : memref<2x17x32xf32, #tpu.memory_space<vmem>>, vector<2x1x32xf32>
    tpu.vector_store %arg5[%c0_13, %c16_14, %c0_15], %17 {strides = array<i32>} : memref<2x17x32xf32, #tpu.memory_space<vmem>>, vector<2x1x32xf32>,
    return
  }
}

</mosaic_0001>

<llo_original>
// kernel: tpu_custom_call.1
$region0: #{tpu_custom_call.1}
  #allocation0 [shape = 'u32[]', space=smem, size = 0x4, offset = 0x4, fixed_abs, tag = 'smem constant byte address 0x4 - core index']
  #allocation1 [shape = 'u32[144,128]{1,0:T(1,128)}', space=vmem, size = 0x12000, scoped, tag = 'internal scratch']
  %s0 = inlined_call_operand.hbm [shape: f32[32,64], index: 0, kind: input, shape index: {}]
  %s1 = inlined_call_operand.hbm [shape: f32[32,64], index: 1, kind: input, shape index: {}]
  %s2 = inlined_call_operand.vmem [shape: f32[1,32], index: 2, kind: input, shape index: {}]
  %s3 = inlined_call_operand.vmem [shape: f32[1,32], index: 3, kind: input, shape index: {}]
  %s4 = inlined_call_operand.hbm [shape: f32[17,32], index: 4, kind: input, shape index: {}]
  %s5 = inlined_call_operand.vmem [shape: f32[2,17,32], index: 5, kind: output, shape index: {}]
  %s6 = sld [smem:[#allocation0]]
  $region42: #{tpu_custom_call.1} parent=0
    _
  %s8 = ssub.s32 1, %s6
  %s9 = scalar_select 0, %s8, %s6
  $region1: #{tpu_custom_call.1} parent=0
    #allocation2 [shape = 'u8[16384]{0}', space=vmem, size = 0x4000, scoped, tag = 'input window, operand 0, single buffered']
    #allocation3 [shape = 's32[1]{0}', space=sflag, size = 0x4, scoped, tag = 'scoped memory for tpu_custom_call.1']
    #allocation4 [shape = 'u8[16384]{0}', space=vmem, size = 0x4000, scoped, tag = 'input window, operand 1, single buffered']
    #allocation5 [shape = 's32[1]{0}', space=sflag, size = 0x4, scoped, tag = 'scoped memory for tpu_custom_call.1']
    #allocation6 [shape = 'u8[12288]{0}', space=vmem, size = 0x3000, scoped, tag = 'input window, operand 4, single buffered']
    %10 = vsyncpa [#allocation3], 0
    %11 = vsyncpa [#allocation5], 0
    // Predicated region
    $region2: #{tpu_custom_call.1} parent=1 // pred_check
      _
    $region3: #{tpu_custom_call.1} parent=1 // pred_check_branch
      %13 = sbr.rel (0) target = $region5
    $region4: #{tpu_custom_call.1} parent=1 // pred_region
      %s15 = ssub.s32 512, 512
      %16 = vsyncadd [#allocation3], %s15
      %s17 = sshll.u32 [#allocation2], 4
      %s18 = int_to_ptr.vmem [resolvable:$true] %s17
      %23 = dma.hbm_to_vmem [thread:$0]  %s0, 512, %s18, [#allocation3], 128, 128, 8
    $region5: #{tpu_custom_call.1} parent=1 // pred_fallthru
      _
    // Predicated region
    $region6: #{tpu_custom_call.1} parent=1 // pred_check
      _
    $region7: #{tpu_custom_call.1} parent=1 // pred_check_branch
      %25 = sbr.rel (0) target = $region9
    $region8: #{tpu_custom_call.1} parent=1 // pred_region
      %s27 = ssub.s32 512, 512
      %28 = vsyncadd [#allocation5], %s27
      %s29 = sshll.u32 [#allocation4], 4
      %s30 = int_to_ptr.vmem [resolvable:$true] %s29
      %35 = dma.hbm_to_vmem [thread:$0]  %s1, 512, %s30, [#allocation5], 128, 128, 8
    $region9: #{tpu_custom_call.1} parent=1 // pred_fallthru
      _
    // Predicated region
    $region10: #{tpu_custom_call.1} parent=1 // pred_check
      _
    $region11: #{tpu_custom_call.1} parent=1 // pred_check_branch
      %37 = sbr.rel (0) target = $region13
    $region12: #{tpu_custom_call.1} parent=1 // pred_region
      _
    $region13: #{tpu_custom_call.1} parent=1 // pred_fallthru
      _
    // Predicated region
    $region14: #{tpu_custom_call.1} parent=1 // pred_check
      _
    $region15: #{tpu_custom_call.1} parent=1 // pred_check_branch
      %39 = sbr.rel (0) target = $region17
    $region16: #{tpu_custom_call.1} parent=1 // pred_region
      _
    $region17: #{tpu_custom_call.1} parent=1 // pred_fallthru
      _
    // Predicated region
    $region18: #{tpu_custom_call.1} parent=1 // pred_check
      _
    $region19: #{tpu_custom_call.1} parent=1 // pred_check_branch
      %41 = sbr.rel (0) target = $region21
    $region20: #{tpu_custom_call.1} parent=1 // pred_region
      %s43 = ssub.s32 384, 384
      %44 = vsyncadd [#allocation5], %s43
      %s45 = sshll.u32 [#allocation6], 4
      %s46 = int_to_ptr.vmem [resolvable:$true] %s45
      %51 = dma.hbm_to_vmem [thread:$0]  %s4, 384, %s46, [#allocation5], 128, 128, 8
    $region21: #{tpu_custom_call.1} parent=1 // pred_fallthru
      _
    // Predicated region
    $region22: #{tpu_custom_call.1} parent=1 // pred_check
      _
    $region23: #{tpu_custom_call.1} parent=1 // pred_check_branch
      %53 = sbr.rel (0) target = $region25
    $region24: #{tpu_custom_call.1} parent=1 // pred_region
      %54 = dma.done [#allocation3], 512
    $region25: #{tpu_custom_call.1} parent=1 // pred_fallthru
      _
    // Predicated region
    $region26: #{tpu_custom_call.1} parent=1 // pred_check
      _
    $region27: #{tpu_custom_call.1} parent=1 // pred_check_branch
      %56 = sbr.rel (0) target = $region29
    $region28: #{tpu_custom_call.1} parent=1 // pred_region
      %57 = dma.done [#allocation5], 512
    $region29: #{tpu_custom_call.1} parent=1 // pred_fallthru
      _
    // Predicated region
    $region30: #{tpu_custom_call.1} parent=1 // pred_check
      _
    $region31: #{tpu_custom_call.1} parent=1 // pred_check_branch
      %59 = sbr.rel (0) target = $region33
    $region32: #{tpu_custom_call.1} parent=1 // pred_region
      %60 = dma.done [#allocation5], 384
    $region33: #{tpu_custom_call.1} parent=1 // pred_fallthru
      _
    %v61 = vld [vmem:[#allocation2] sm:$0xff]
    %v62 = vld [vmem:[#allocation2 + $0x8] sm:$0xff]
    %v63 = vld [vmem:[#allocation2 + $0x10] sm:$0xff]
    %v64 = vld [vmem:[#allocation2 + $0x18] sm:$0xff]
    %v65 = vld [vmem:[#allocation4] sm:$0xff]
    %v66 = vld [vmem:[#allocation4 + $0x8] sm:$0xff]
    %v67 = vld [vmem:[#allocation4 + $0x10] sm:$0xff]
    %v68 = vld [vmem:[#allocation4 + $0x18] sm:$0xff]
    %vm69 = vcmask 523264
    %v71 = vsel %vm69, %v61, 0
    %v74 = vsel %vm69, %v62, 0
    %v77 = vsel %vm69, %v63, 0
    %v80 = vsel %vm69, %v64, 0
    %v83 = vsel %vm69, %v65, 0
    %v86 = vsel %vm69, %v66, 0
    %v89 = vsel %vm69, %v67, 0
    %v92 = vsel %vm69, %v68, 0
    %94 = vmatprep.subr.mxu0 0.0
    %95 = vmatpush1.xpose.msra.mxu0 0.0
    %96 = vmatprep.subr.mxu0 0.0
    %97 = vmatpush1.xpose.msra.mxu0 0.0
    %98 = vmatprep.subr.mxu0 0.0
    %99 = vmatpush1.xpose.msra.mxu0 0.0
    %100 = vmatprep.subr.mxu0 0.0
    %101 = vmatpush1.xpose.msra.mxu0 0.0
    %102 = vmatprep.subr.mxu0 0.0
    %103 = vmatpush1.xpose.msra.mxu0 0.0
    %104 = vmatprep.subr.mxu0 0.0
    %105 = vmatpush1.xpose.msra.mxu0 0.0
    %106 = vmatprep.subr.mxu0 0.0
    %107 = vmatpush1.xpose.msra.mxu0 0.0
    %108 = vmatprep.subr.mxu0 0.0
    %109 = vmatpush1.xpose.msra.mxu0 0.0
    %110 = vmatprep.subr.mxu0 0.0
    %111 = vmatpush1.xpose.msra.mxu0 0.0
    %112 = vmatprep.subr.mxu0 0.0
    %113 = vmatpush1.xpose.msra.mxu0 0.0
    %114 = vmatprep.subr.mxu0 0.0
    %115 = vmatpush1.xpose.msra.mxu0 0.0
    %116 = vmatprep.subr.mxu0 0.0
    %117 = vmatpush1.xpose.msra.mxu0 0.0
    %118 = vmatprep.subr.mxu0 0.0
    %v119 = vand.u32 %v92, 4294901760
    %120 = vmatpush1.xpose.msra.mxu0 %v119
    %121 = vmatprep.subr.mxu0 0.0
    %v122 = vand.u32 %v89, 4294901760
    %123 = vmatpush1.xpose.msra.mxu0 %v122
    %124 = vmatprep.subr.mxu0 0.0
    %v125 = vand.u32 %v86, 4294901760
    %126 = vmatpush1.xpose.msra.mxu0 %v125
    %127 = vmatprep.subr.mxu0 0.0
    %v128 = vand.u32 %v83, 4294901760
    %129 = vmatpush1.xpose.msra.mxu0 %v128
    %130 = vmatprep.subr.mxu0 0.0
    %131 = vmatpush2.xpose.msra.mxu0 0.0
    %132 = vmatprep.subr.mxu0 0.0
    %133 = vmatpush2.xpose.msra.mxu0 0.0
    %134 = vmatprep.subr.mxu0 0.0
    %135 = vmatpush2.xpose.msra.mxu0 0.0
    %136 = vmatprep.subr.mxu0 0.0
    %137 = vmatpush2.xpose.msra.mxu0 0.0
    %138 = vmatprep.subr.mxu0 0.0
    %139 = vmatpush2.xpose.msra.mxu0 0.0
    %140 = vmatprep.subr.mxu0 0.0
    %141 = vmatpush2.xpose.msra.mxu0 0.0
    %142 = vmatprep.subr.mxu0 0.0
    %143 = vmatpush2.xpose.msra.mxu0 0.0
    %144 = vmatprep.subr.mxu0 0.0
    %145 = vmatpush2.xpose.msra.mxu0 0.0
    %146 = vmatprep.subr.mxu0 0.0
    %147 = vmatpush2.xpose.msra.mxu0 0.0
    %148 = vmatprep.subr.mxu0 0.0
    %149 = vmatpush2.xpose.msra.mxu0 0.0
    %150 = vmatprep.subr.mxu0 0.0
    %151 = vmatpush2.xpose.msra.mxu0 0.0
    %152 = vmatprep.subr.mxu0 0.0
    %153 = vmatpush2.xpose.msra.mxu0 0.0
    %154 = vmatprep.subr.mxu0 0.0
    %155 = vmatpush2.xpose.msra.mxu0 0.0
    %156 = vmatprep.subr.mxu0 0.0
    %157 = vmatpush2.xpose.msra.mxu0 0.0
    %158 = vmatprep.subr.mxu0 0.0
    %159 = vmatpush2.xpose.msra.mxu0 0.0
    %160 = vmatprep.subr.mxu0 0.0
    %161 = vmatpush2.xpose.msra.mxu0 0.0
    %162 = vmatprep.mubr.f32.mxu0 0.0
    %v163 = vand.u32 %v71, 4294901760
    %v164 = vsub.f32 %v71, %v163
    %v165 = vand.u32 %v164, 4294901760
    %v166 = vsub.f32 %v164, %v165
    %v167 = vand.u32 %v166, 4294901760
    %168 = vmatmul.mubr.f32.gmra.mxu0 %v167
    %v169 = vpop.f32.mrf.mxu0
    %v170 = vadd.f32 0.0, %v169
    %v171 = vpop.f32.mrf.mxu0
    %172 = vmatprep.mubr.f32.mxu0 0.0
    %v173 = vand.u32 %v74, 4294901760
    %v174 = vsub.f32 %v74, %v173
    %v175 = vand.u32 %v174, 4294901760
    %v176 = vsub.f32 %v174, %v175
    %v177 = vand.u32 %v176, 4294901760
    %178 = vmatmul.mubr.f32.gmra.mxu0 %v177
    %v179 = vpop.f32.mrf.mxu0
    %v180 = vadd.f32 0.0, %v179
    %v181 = vpop.f32.mrf.mxu0
    %182 = vmatprep.mubr.f32.mxu0 0.0
    %v183 = vand.u32 %v77, 4294901760
    %v184 = vsub.f32 %v77, %v183
    %v185 = vand.u32 %v184, 4294901760
    %v186 = vsub.f32 %v184, %v185
    %v187 = vand.u32 %v186, 4294901760
    %188 = vmatmul.mubr.f32.gmra.mxu0 %v187
    %v189 = vpop.f32.mrf.mxu0
    %v190 = vadd.f32 0.0, %v189
    %v191 = vpop.f32.mrf.mxu0
    %192 = vmatprep.mubr.f32.mxu0 0.0
    %v193 = vand.u32 %v80, 4294901760
    %v194 = vsub.f32 %v80, %v193
    %v195 = vand.u32 %v194, 4294901760
    %v196 = vsub.f32 %v194, %v195
    %v197 = vand.u32 %v196, 4294901760
    %198 = vmatmul.mubr.f32.gmra.mxu0 %v197
    %v199 = vpop.f32.mrf.mxu0
    %v200 = vadd.f32 0.0, %v199
    %v201 = vpop.f32.mrf.mxu0
    %202 = vdwg.mxu0
    %203 = vmatprep.subr.mxu0 0.0
    %204 = vmatpush1.xpose.msra.mxu0 0.0
    %205 = vmatprep.subr.mxu0 0.0
    %206 = vmatpush1.xpose.msra.mxu0 0.0
    %207 = vmatprep.subr.mxu0 0.0
    %208 = vmatpush1.xpose.msra.mxu0 0.0
    %209 = vmatprep.subr.mxu0 0.0
    %210 = vmatpush1.xpose.msra.mxu0 0.0
    %211 = vmatprep.subr.mxu0 0.0
    %212 = vmatpush1.xpose.msra.mxu0 0.0
    %213 = vmatprep.subr.mxu0 0.0
    %214 = vmatpush1.xpose.msra.mxu0 0.0
    %215 = vmatprep.subr.mxu0 0.0
    %216 = vmatpush1.xpose.msra.mxu0 0.0
    %217 = vmatprep.subr.mxu0 0.0
    %218 = vmatpush1.xpose.msra.mxu0 0.0
    %219 = vmatprep.subr.mxu0 0.0
    %220 = vmatpush1.xpose.msra.mxu0 0.0
    %221 = vmatprep.subr.mxu0 0.0
    %222 = vmatpush1.xpose.msra.mxu0 0.0
    %223 = vmatprep.subr.mxu0 0.0
    %224 = vmatpush1.xpose.msra.mxu0 0.0
    %225 = vmatprep.subr.mxu0 0.0
    %226 = vmatpush1.xpose.msra.mxu0 0.0
    %227 = vmatprep.subr.mxu0 0.0
    %v228 = vand.u32 %v92, 4294901760
    %v229 = vsub.f32 %v92, %v228
    %v230 = vand.u32 %v229, 4294901760
    %v231 = vsub.f32 %v229, %v230
    %v232 = vand.u32 %v231, 4294901760
    %233 = vmatpush1.xpose.msra.mxu0 %v232
    %234 = vmatprep.subr.mxu0 0.0
    %v235 = vand.u32 %v89, 4294901760
    %v236 = vsub.f32 %v89, %v235
    %v237 = vand.u32 %v236, 4294901760
    %v238 = vsub.f32 %v236, %v237
    %v239 = vand.u32 %v238, 4294901760
    %240 = vmatpush1.xpose.msra.mxu0 %v239
    %241 = vmatprep.subr.mxu0 0.0
    %v242 = vand.u32 %v86, 4294901760
    %v243 = vsub.f32 %v86, %v242
    %v244 = vand.u32 %v243, 4294901760
    %v245 = vsub.f32 %v243, %v244
    %v246 = vand.u32 %v245, 4294901760
    %247 = vmatpush1.xpose.msra.mxu0 %v246
    %248 = vmatprep.subr.mxu0 0.0
    %v249 = vand.u32 %v83, 4294901760
    %v250 = vsub.f32 %v83, %v249
    %v251 = vand.u32 %v250, 4294901760
    %v252 = vsub.f32 %v250, %v251
    %v253 = vand.u32 %v252, 4294901760
    %254 = vmatpush1.xpose.msra.mxu0 %v253
    %255 = vmatprep.subr.mxu0 0.0
    %256 = vmatpush2.xpose.msra.mxu0 0.0
    %257 = vmatprep.subr.mxu0 0.0
    %258 = vmatpush2.xpose.msra.mxu0 0.0
    %259 = vmatprep.subr.mxu0 0.0
    %260 = vmatpush2.xpose.msra.mxu0 0.0
    %261 = vmatprep.subr.mxu0 0.0
    %262 = vmatpush2.xpose.msra.mxu0 0.0
    %263 = vmatprep.subr.mxu0 0.0
    %264 = vmatpush2.xpose.msra.mxu0 0.0
    %265 = vmatprep.subr.mxu0 0.0
    %266 = vmatpush2.xpose.msra.mxu0 0.0
    %267 = vmatprep.subr.mxu0 0.0
    %268 = vmatpush2.xpose.msra.mxu0 0.0
    %269 = vmatprep.subr.mxu0 0.0
    %270 = vmatpush2.xpose.msra.mxu0 0.0
    %271 = vmatprep.subr.mxu0 0.0
    %272 = vmatpush2.xpose.msra.mxu0 0.0
    %273 = vmatprep.subr.mxu0 0.0
    %274 = vmatpush2.xpose.msra.mxu0 0.0
    %275 = vmatprep.subr.mxu0 0.0
    %276 = vmatpush2.xpose.msra.mxu0 0.0
    %277 = vmatprep.subr.mxu0 0.0
    %278 = vmatpush2.xpose.msra.mxu0 0.0
    %279 = vmatprep.subr.mxu0 0.0
    %280 = vmatpush2.xpose.msra.mxu0 0.0
    %281 = vmatprep.subr.mxu0 0.0
    %282 = vmatpush2.xpose.msra.mxu0 0.0
    %283 = vmatprep.subr.mxu0 0.0
    %284 = vmatpush2.xpose.msra.mxu0 0.0
    %285 = vmatprep.subr.mxu0 0.0
    %286 = vmatpush2.xpose.msra.mxu0 0.0
    %287 = vmatprep.mubr.f32.mxu0 0.0
    %v288 = vand.u32 %v71, 4294901760
    %289 = vmatmul.mubr.f32.gmra.mxu0 %v288
    %v290 = vpop.f32.mrf.mxu0
    %v291 = vadd.f32 %v170, %v290
    %v292 = vpop.f32.mrf.mxu0
    %293 = vmatprep.mubr.f32.mxu0 0.0
    %v294 = vand.u32 %v74, 4294901760
    %295 = vmatmul.mubr.f32.gmra.mxu0 %v294
    %v296 = vpop.f32.mrf.mxu0
    %v297 = vadd.f32 %v180, %v296
    %v298 = vpop.f32.mrf.mxu0
    %299 = vmatprep.mubr.f32.mxu0 0.0
    %v300 = vand.u32 %v77, 4294901760
    %301 = vmatmul.mubr.f32.gmra.mxu0 %v300
    %v302 = vpop.f32.mrf.mxu0
    %v303 = vadd.f32 %v190, %v302
    %v304 = vpop.f32.mrf.mxu0
    %305 = vmatprep.mubr.f32.mxu0 0.0
    %v306 = vand.u32 %v80, 4294901760
    %307 = vmatmul.mubr.f32.gmra.mxu0 %v306
    %v308 = vpop.f32.mrf.mxu0
    %v309 = vadd.f32 %v200, %v308
    %v310 = vpop.f32.mrf.mxu0
    %311 = vdwg.mxu0
    %312 = vmatprep.subr.mxu0 0.0
    %313 = vmatpush1.xpose.msra.mxu0 0.0
    %314 = vmatprep.subr.mxu0 0.0
    %315 = vmatpush1.xpose.msra.mxu0 0.0
    %316 = vmatprep.subr.mxu0 0.0
    %317 = vmatpush1.xpose.msra.mxu0 0.0
    %318 = vmatprep.subr.mxu0 0.0
    %319 = vmatpush1.xpose.msra.mxu0 0.0
    %320 = vmatprep.subr.mxu0 0.0
    %321 = vmatpush1.xpose.msra.mxu0 0.0
    %322 = vmatprep.subr.mxu0 0.0
    %323 = vmatpush1.xpose.msra.mxu0 0.0
    %324 = vmatprep.subr.mxu0 0.0
    %325 = vmatpush1.xpose.msra.mxu0 0.0
    %326 = vmatprep.subr.mxu0 0.0
    %327 = vmatpush1.xpose.msra.mxu0 0.0
    %328 = vmatprep.subr.mxu0 0.0
    %329 = vmatpush1.xpose.msra.mxu0 0.0
    %330 = vmatprep.subr.mxu0 0.0
    %331 = vmatpush1.xpose.msra.mxu0 0.0
    %332 = vmatprep.subr.mxu0 0.0
    %333 = vmatpush1.xpose.msra.mxu0 0.0
    %334 = vmatprep.subr.mxu0 0.0
    %335 = vmatpush1.xpose.msra.mxu0 0.0
    %336 = vmatprep.subr.mxu0 0.0
    %v337 = vand.u32 %v92, 4294901760
    %v338 = vsub.f32 %v92, %v337
    %339 = vmatpush1.xpose.msra.mxu0 %v338
    %340 = vmatprep.subr.mxu0 0.0
    %v341 = vand.u32 %v89, 4294901760
    %v342 = vsub.f32 %v89, %v341
    %343 = vmatpush1.xpose.msra.mxu0 %v342
    %344 = vmatprep.subr.mxu0 0.0
    %v345 = vand.u32 %v86, 4294901760
    %v346 = vsub.f32 %v86, %v345
    %347 = vmatpush1.xpose.msra.mxu0 %v346
    %348 = vmatprep.subr.mxu0 0.0
    %v349 = vand.u32 %v83, 4294901760
    %v350 = vsub.f32 %v83, %v349
    %351 = vmatpush1.xpose.msra.mxu0 %v350
    %352 = vmatprep.subr.mxu0 0.0
    %353 = vmatpush2.xpose.msra.mxu0 0.0
    %354 = vmatprep.subr.mxu0 0.0
    %355 = vmatpush2.xpose.msra.mxu0 0.0
    %356 = vmatprep.subr.mxu0 0.0
    %357 = vmatpush2.xpose.msra.mxu0 0.0
    %358 = vmatprep.subr.mxu0 0.0
    %359 = vmatpush2.xpose.msra.mxu0 0.0
    %360 = vmatprep.subr.mxu0 0.0
    %361 = vmatpush2.xpose.msra.mxu0 0.0
    %362 = vmatprep.subr.mxu0 0.0
    %363 = vmatpush2.xpose.msra.mxu0 0.0
    %364 = vmatprep.subr.mxu0 0.0
    %365 = vmatpush2.xpose.msra.mxu0 0.0
    %366 = vmatprep.subr.mxu0 0.0
    %367 = vmatpush2.xpose.msra.mxu0 0.0
    %368 = vmatprep.subr.mxu0 0.0
    %369 = vmatpush2.xpose.msra.mxu0 0.0
    %370 = vmatprep.subr.mxu0 0.0
    %371 = vmatpush2.xpose.msra.mxu0 0.0
    %372 = vmatprep.subr.mxu0 0.0
    %373 = vmatpush2.xpose.msra.mxu0 0.0
    %374 = vmatprep.subr.mxu0 0.0
    %375 = vmatpush2.xpose.msra.mxu0 0.0
    %376 = vmatprep.subr.mxu0 0.0
    %377 = vmatpush2.xpose.msra.mxu0 0.0
    %378 = vmatprep.subr.mxu0 0.0
    %379 = vmatpush2.xpose.msra.mxu0 0.0
    %380 = vmatprep.subr.mxu0 0.0
    %381 = vmatpush2.xpose.msra.mxu0 0.0
    %382 = vmatprep.subr.mxu0 0.0
    %383 = vmatpush2.xpose.msra.mxu0 0.0
    %384 = vmatprep.mubr.f32.mxu0 0.0
    %v385 = vand.u32 %v71, 4294901760
    %v386 = vsub.f32 %v71, %v385
    %387 = vmatmul.mubr.f32.gmra.mxu0 %v386
    %v388 = vpop.f32.mrf.mxu0
    %v389 = vadd.f32 %v291, %v388
    %v390 = vpop.f32.mrf.mxu0
    %391 = vmatprep.mubr.f32.mxu0 0.0
    %v392 = vand.u32 %v74, 4294901760
    %v393 = vsub.f32 %v74, %v392
    %394 = vmatmul.mubr.f32.gmra.mxu0 %v393
    %v395 = vpop.f32.mrf.mxu0
    %v396 = vadd.f32 %v297, %v395
    %v397 = vpop.f32.mrf.mxu0
    %398 = vmatprep.mubr.f32.mxu0 0.0
    %v399 = vand.u32 %v77, 4294901760
    %v400 = vsub.f32 %v77, %v399
    %401 = vmatmul.mubr.f32.gmra.mxu0 %v400
    %v402 = vpop.f32.mrf.mxu0
    %v403 = vadd.f32 %v303, %v402
    %v404 = vpop.f32.mrf.mxu0
    %405 = vmatprep.mubr.f32.mxu0 0.0
    %v406 = vand.u32 %v80, 4294901760
    %v407 = vsub.f32 %v80, %v406
    %408 = vmatmul.mubr.f32.gmra.mxu0 %v407
    %v409 = vpop.f32.mrf.mxu0
    %v410 = vadd.f32 %v309, %v409
    %v411 = vpop.f32.mrf.mxu0
    %412 = vdwg.mxu0
    %413 = vmatprep.subr.mxu0 0.0
    %414 = vmatpush1.xpose.msra.mxu0 0.0
    %415 = vmatprep.subr.mxu0 0.0
    %416 = vmatpush1.xpose.msra.mxu0 0.0
    %417 = vmatprep.subr.mxu0 0.0
    %418 = vmatpush1.xpose.msra.mxu0 0.0
    %419 = vmatprep.subr.mxu0 0.0
    %420 = vmatpush1.xpose.msra.mxu0 0.0
    %421 = vmatprep.subr.mxu0 0.0
    %422 = vmatpush1.xpose.msra.mxu0 0.0
    %423 = vmatprep.subr.mxu0 0.0
    %424 = vmatpush1.xpose.msra.mxu0 0.0
    %425 = vmatprep.subr.mxu0 0.0
    %426 = vmatpush1.xpose.msra.mxu0 0.0
    %427 = vmatprep.subr.mxu0 0.0
    %428 = vmatpush1.xpose.msra.mxu0 0.0
    %429 = vmatprep.subr.mxu0 0.0
    %430 = vmatpush1.xpose.msra.mxu0 0.0
    %431 = vmatprep.subr.mxu0 0.0
    %432 = vmatpush1.xpose.msra.mxu0 0.0
    %433 = vmatprep.subr.mxu0 0.0
    %434 = vmatpush1.xpose.msra.mxu0 0.0
    %435 = vmatprep.subr.mxu0 0.0
    %436 = vmatpush1.xpose.msra.mxu0 0.0
    %437 = vmatprep.subr.mxu0 0.0
    %v438 = vand.u32 %v92, 4294901760
    %439 = vmatpush1.xpose.msra.mxu0 %v438
    %440 = vmatprep.subr.mxu0 0.0
    %v441 = vand.u32 %v89, 4294901760
    %442 = vmatpush1.xpose.msra.mxu0 %v441
    %443 = vmatprep.subr.mxu0 0.0
    %v444 = vand.u32 %v86, 4294901760
    %445 = vmatpush1.xpose.msra.mxu0 %v444
    %446 = vmatprep.subr.mxu0 0.0
    %v447 = vand.u32 %v83, 4294901760
    %448 = vmatpush1.xpose.msra.mxu0 %v447
    %449 = vmatprep.subr.mxu0 0.0
    %450 = vmatpush2.xpose.msra.mxu0 0.0
    %451 = vmatprep.subr.mxu0 0.0
    %452 = vmatpush2.xpose.msra.mxu0 0.0
    %453 = vmatprep.subr.mxu0 0.0
    %454 = vmatpush2.xpose.msra.mxu0 0.0
    %455 = vmatprep.subr.mxu0 0.0
    %456 = vmatpush2.xpose.msra.mxu0 0.0
    %457 = vmatprep.subr.mxu0 0.0
    %458 = vmatpush2.xpose.msra.mxu0 0.0
    %459 = vmatprep.subr.mxu0 0.0
    %460 = vmatpush2.xpose.msra.mxu0 0.0
    %461 = vmatprep.subr.mxu0 0.0
    %462 = vmatpush2.xpose.msra.mxu0 0.0
    %463 = vmatprep.subr.mxu0 0.0
    %464 = vmatpush2.xpose.msra.mxu0 0.0
    %465 = vmatprep.subr.mxu0 0.0
    %466 = vmatpush2.xpose.msra.mxu0 0.0
    %467 = vmatprep.subr.mxu0 0.0
    %468 = vmatpush2.xpose.msra.mxu0 0.0
    %469 = vmatprep.subr.mxu0 0.0
    %470 = vmatpush2.xpose.msra.mxu0 0.0
    %471 = vmatprep.subr.mxu0 0.0
    %472 = vmatpush2.xpose.msra.mxu0 0.0
    %473 = vmatprep.subr.mxu0 0.0
    %474 = vmatpush2.xpose.msra.mxu0 0.0
    %475 = vmatprep.subr.mxu0 0.0
    %476 = vmatpush2.xpose.msra.mxu0 0.0
    %477 = vmatprep.subr.mxu0 0.0
    %478 = vmatpush2.xpose.msra.mxu0 0.0
    %479 = vmatprep.subr.mxu0 0.0
    %480 = vmatpush2.xpose.msra.mxu0 0.0
    %481 = vmatprep.mubr.f32.mxu0 0.0
    %v482 = vand.u32 %v71, 4294901760
    %v483 = vsub.f32 %v71, %v482
    %v484 = vand.u32 %v483, 4294901760
    %485 = vmatmul.mubr.f32.gmra.mxu0 %v484
    %v486 = vpop.f32.mrf.mxu0
    %v487 = vadd.f32 %v389, %v486
    %v488 = vpop.f32.mrf.mxu0
    %489 = vmatprep.mubr.f32.mxu0 0.0
    %v490 = vand.u32 %v74, 4294901760
    %v491 = vsub.f32 %v74, %v490
    %v492 = vand.u32 %v491, 4294901760
    %493 = vmatmul.mubr.f32.gmra.mxu0 %v492
    %v494 = vpop.f32.mrf.mxu0
    %v495 = vadd.f32 %v396, %v494
    %v496 = vpop.f32.mrf.mxu0
    %497 = vmatprep.mubr.f32.mxu0 0.0
    %v498 = vand.u32 %v77, 4294901760
    %v499 = vsub.f32 %v77, %v498
    %v500 = vand.u32 %v499, 4294901760
    %501 = vmatmul.mubr.f32.gmra.mxu0 %v500
    %v502 = vpop.f32.mrf.mxu0
    %v503 = vadd.f32 %v403, %v502
    %v504 = vpop.f32.mrf.mxu0
    %505 = vmatprep.mubr.f32.mxu0 0.0
    %v506 = vand.u32 %v80, 4294901760
    %v507 = vsub.f32 %v80, %v506
    %v508 = vand.u32 %v507, 4294901760
    %509 = vmatmul.mubr.f32.gmra.mxu0 %v508
    %v510 = vpop.f32.mrf.mxu0
    %v511 = vadd.f32 %v410, %v510
    %v512 = vpop.f32.mrf.mxu0
    %513 = vdwg.mxu0
    %514 = vmatprep.subr.mxu0 0.0
    %515 = vmatpush1.xpose.msra.mxu0 0.0
    %516 = vmatprep.subr.mxu0 0.0
    %517 = vmatpush1.xpose.msra.mxu0 0.0
    %518 = vmatprep.subr.mxu0 0.0
    %519 = vmatpush1.xpose.msra.mxu0 0.0
    %520 = vmatprep.subr.mxu0 0.0
    %521 = vmatpush1.xpose.msra.mxu0 0.0
    %522 = vmatprep.subr.mxu0 0.0
    %523 = vmatpush1.xpose.msra.mxu0 0.0
    %524 = vmatprep.subr.mxu0 0.0
    %525 = vmatpush1.xpose.msra.mxu0 0.0
    %526 = vmatprep.subr.mxu0 0.0
    %527 = vmatpush1.xpose.msra.mxu0 0.0
    %528 = vmatprep.subr.mxu0 0.0
    %529 = vmatpush1.xpose.msra.mxu0 0.0
    %530 = vmatprep.subr.mxu0 0.0
    %531 = vmatpush1.xpose.msra.mxu0 0.0
    %532 = vmatprep.subr.mxu0 0.0
    %533 = vmatpush1.xpose.msra.mxu0 0.0
    %534 = vmatprep.subr.mxu0 0.0
    %535 = vmatpush1.xpose.msra.mxu0 0.0
    %536 = vmatprep.subr.mxu0 0.0
    %537 = vmatpush1.xpose.msra.mxu0 0.0
    %538 = vmatprep.subr.mxu0 0.0
    %v539 = vand.u32 %v92, 4294901760
    %v540 = vsub.f32 %v92, %v539
    %v541 = vand.u32 %v540, 4294901760
    %542 = vmatpush1.xpose.msra.mxu0 %v541
    %543 = vmatprep.subr.mxu0 0.0
    %v544 = vand.u32 %v89, 4294901760
    %v545 = vsub.f32 %v89, %v544
    %v546 = vand.u32 %v545, 4294901760
    %547 = vmatpush1.xpose.msra.mxu0 %v546
    %548 = vmatprep.subr.mxu0 0.0
    %v549 = vand.u32 %v86, 4294901760
    %v550 = vsub.f32 %v86, %v549
    %v551 = vand.u32 %v550, 4294901760
    %552 = vmatpush1.xpose.msra.mxu0 %v551
    %553 = vmatprep.subr.mxu0 0.0
    %v554 = vand.u32 %v83, 4294901760
    %v555 = vsub.f32 %v83, %v554
    %v556 = vand.u32 %v555, 4294901760
    %557 = vmatpush1.xpose.msra.mxu0 %v556
    %558 = vmatprep.subr.mxu0 0.0
    %559 = vmatpush2.xpose.msra.mxu0 0.0
    %560 = vmatprep.subr.mxu0 0.0
    %561 = vmatpush2.xpose.msra.mxu0 0.0
    %562 = vmatprep.subr.mxu0 0.0
    %563 = vmatpush2.xpose.msra.mxu0 0.0
    %564 = vmatprep.subr.mxu0 0.0
    %565 = vmatpush2.xpose.msra.mxu0 0.0
    %566 = vmatprep.subr.mxu0 0.0
    %567 = vmatpush2.xpose.msra.mxu0 0.0
    %568 = vmatprep.subr.mxu0 0.0
    %569 = vmatpush2.xpose.msra.mxu0 0.0
    %570 = vmatprep.subr.mxu0 0.0
    %571 = vmatpush2.xpose.msra.mxu0 0.0
    %572 = vmatprep.subr.mxu0 0.0
    %573 = vmatpush2.xpose.msra.mxu0 0.0
    %574 = vmatprep.subr.mxu0 0.0
    %575 = vmatpush2.xpose.msra.mxu0 0.0
    %576 = vmatprep.subr.mxu0 0.0
    %577 = vmatpush2.xpose.msra.mxu0 0.0
    %578 = vmatprep.subr.mxu0 0.0
    %579 = vmatpush2.xpose.msra.mxu0 0.0
    %580 = vmatprep.subr.mxu0 0.0
    %581 = vmatpush2.xpose.msra.mxu0 0.0
    %582 = vmatprep.subr.mxu0 0.0
    %583 = vmatpush2.xpose.msra.mxu0 0.0
    %584 = vmatprep.subr.mxu0 0.0
    %585 = vmatpush2.xpose.msra.mxu0 0.0
    %586 = vmatprep.subr.mxu0 0.0
    %587 = vmatpush2.xpose.msra.mxu0 0.0
    %588 = vmatprep.subr.mxu0 0.0
    %589 = vmatpush2.xpose.msra.mxu0 0.0
    %590 = vmatprep.mubr.f32.mxu0 0.0
    %v591 = vand.u32 %v71, 4294901760
    %592 = vmatmul.mubr.f32.gmra.mxu0 %v591
    %v593 = vpop.f32.mrf.mxu0
    %v594 = vadd.f32 %v487, %v593
    %v595 = vpop.f32.mrf.mxu0
    %596 = vmatprep.mubr.f32.mxu0 0.0
    %v597 = vand.u32 %v74, 4294901760
    %598 = vmatmul.mubr.f32.gmra.mxu0 %v597
    %v599 = vpop.f32.mrf.mxu0
    %v600 = vadd.f32 %v495, %v599
    %v601 = vpop.f32.mrf.mxu0
    %602 = vmatprep.mubr.f32.mxu0 0.0
    %v603 = vand.u32 %v77, 4294901760
    %604 = vmatmul.mubr.f32.gmra.mxu0 %v603
    %v605 = vpop.f32.mrf.mxu0
    %v606 = vadd.f32 %v503, %v605
    %v607 = vpop.f32.mrf.mxu0
    %608 = vmatprep.mubr.f32.mxu0 0.0
    %v609 = vand.u32 %v80, 4294901760
    %610 = vmatmul.mubr.f32.gmra.mxu0 %v609
    %v611 = vpop.f32.mrf.mxu0
    %v612 = vadd.f32 %v511, %v611
    %v613 = vpop.f32.mrf.mxu0
    %614 = vdwg.mxu0
    %615 = vmatprep.subr.mxu0 0.0
    %616 = vmatpush1.xpose.msra.mxu0 0.0
    %617 = vmatprep.subr.mxu0 0.0
    %618 = vmatpush1.xpose.msra.mxu0 0.0
    %619 = vmatprep.subr.mxu0 0.0
    %620 = vmatpush1.xpose.msra.mxu0 0.0
    %621 = vmatprep.subr.mxu0 0.0
    %622 = vmatpush1.xpose.msra.mxu0 0.0
    %623 = vmatprep.subr.mxu0 0.0
    %624 = vmatpush1.xpose.msra.mxu0 0.0
    %625 = vmatprep.subr.mxu0 0.0
    %626 = vmatpush1.xpose.msra.mxu0 0.0
    %627 = vmatprep.subr.mxu0 0.0
    %628 = vmatpush1.xpose.msra.mxu0 0.0
    %629 = vmatprep.subr.mxu0 0.0
    %630 = vmatpush1.xpose.msra.mxu0 0.0
    %631 = vmatprep.subr.mxu0 0.0
    %632 = vmatpush1.xpose.msra.mxu0 0.0
    %633 = vmatprep.subr.mxu0 0.0
    %634 = vmatpush1.xpose.msra.mxu0 0.0
    %635 = vmatprep.subr.mxu0 0.0
    %636 = vmatpush1.xpose.msra.mxu0 0.0
    %637 = vmatprep.subr.mxu0 0.0
    %638 = vmatpush1.xpose.msra.mxu0 0.0
    %639 = vmatprep.subr.mxu0 0.0
    %v640 = vand.u32 %v92, 4294901760
    %641 = vmatpush1.xpose.msra.mxu0 %v640
    %642 = vmatprep.subr.mxu0 0.0
    %v643 = vand.u32 %v89, 4294901760
    %644 = vmatpush1.xpose.msra.mxu0 %v643
    %645 = vmatprep.subr.mxu0 0.0
    %v646 = vand.u32 %v86, 4294901760
    %647 = vmatpush1.xpose.msra.mxu0 %v646
    %648 = vmatprep.subr.mxu0 0.0
    %v649 = vand.u32 %v83, 4294901760
    %650 = vmatpush1.xpose.msra.mxu0 %v649
    %651 = vmatprep.subr.mxu0 0.0
    %652 = vmatpush2.xpose.msra.mxu0 0.0
    %653 = vmatprep.subr.mxu0 0.0
    %654 = vmatpush2.xpose.msra.mxu0 0.0
    %655 = vmatprep.subr.mxu0 0.0
    %656 = vmatpush2.xpose.msra.mxu0 0.0
    %657 = vmatprep.subr.mxu0 0.0
    %658 = vmatpush2.xpose.msra.mxu0 0.0
    %659 = vmatprep.subr.mxu0 0.0
    %660 = vmatpush2.xpose.msra.mxu0 0.0
    %661 = vmatprep.subr.mxu0 0.0
    %662 = vmatpush2.xpose.msra.mxu0 0.0
    %663 = vmatprep.subr.mxu0 0.0
    %664 = vmatpush2.xpose.msra.mxu0 0.0
    %665 = vmatprep.subr.mxu0 0.0
    %666 = vmatpush2.xpose.msra.mxu0 0.0
    %667 = vmatprep.subr.mxu0 0.0
    %668 = vmatpush2.xpose.msra.mxu0 0.0
    %669 = vmatprep.subr.mxu0 0.0
    %670 = vmatpush2.xpose.msra.mxu0 0.0
    %671 = vmatprep.subr.mxu0 0.0
    %672 = vmatpush2.xpose.msra.mxu0 0.0
    %673 = vmatprep.subr.mxu0 0.0
    %674 = vmatpush2.xpose.msra.mxu0 0.0
    %675 = vmatprep.subr.mxu0 0.0
    %676 = vmatpush2.xpose.msra.mxu0 0.0
    %677 = vmatprep.subr.mxu0 0.0
    %678 = vmatpush2.xpose.msra.mxu0 0.0
    %679 = vmatprep.subr.mxu0 0.0
    %680 = vmatpush2.xpose.msra.mxu0 0.0
    %681 = vmatprep.subr.mxu0 0.0
    %682 = vmatpush2.xpose.msra.mxu0 0.0
    %683 = vmatprep.mubr.f32.mxu0 0.0
    %v684 = vand.u32 %v71, 4294901760
    %685 = vmatmul.mubr.f32.gmra.mxu0 %v684
    %v686 = vpop.f32.mrf.mxu0
    %v687 = vadd.f32 %v594, %v686
    %v688 = vpop.f32.mrf.mxu0
    %689 = vmatprep.mubr.f32.mxu0 0.0
    %v690 = vand.u32 %v74, 4294901760
    %691 = vmatmul.mubr.f32.gmra.mxu0 %v690
    %v692 = vpop.f32.mrf.mxu0
    %v693 = vadd.f32 %v600, %v692
    %v694 = vpop.f32.mrf.mxu0
    %695 = vmatprep.mubr.f32.mxu0 0.0
    %v696 = vand.u32 %v77, 4294901760
    %697 = vmatmul.mubr.f32.gmra.mxu0 %v696
    %v698 = vpop.f32.mrf.mxu0
    %v699 = vadd.f32 %v606, %v698
    %v700 = vpop.f32.mrf.mxu0
    %701 = vmatprep.mubr.f32.mxu0 0.0
    %v702 = vand.u32 %v80, 4294901760
    %703 = vmatmul.mubr.f32.gmra.mxu0 %v702
    %v704 = vpop.f32.mrf.mxu0
    %v705 = vadd.f32 %v612, %v704
    %v706 = vpop.f32.mrf.mxu0
    %707 = vdwg.mxu0
    %v708 = vld [vmem:[#allocation6] sm:$0xff]
    %v709 = vld [vmem:[#allocation6 + $0x8] sm:$0xff]
    %v710 = vld [vmem:[%s2] sm:$0x1]
    %v712 = vlaneseq
    %v713 = vshrl.u32 %v712, 7
    %v714 = vsub.s32 0, %v713
    %v715 = vrot.slane %v710, %v714
    %v717 = vadd.f32 %v708, %v715
    %v718 = vadd.f32 %v709, %v715
    %v719 = vld [vmem:[%s3] sm:$0x1]
    %v720 = vld [vmem:[#allocation6 + $0x10] sm:$0x1]
    %v721 = vadd.f32 %v719, %v720
    %v722 = vadd.f32 %v687, %v717
    %v723 = vadd.f32 %v693, %v718
    %v724 = vadd.f32 %v699, %v717
    %v725 = vadd.f32 %v705, %v718
    %vm726 = vcmask 261120
    %727 = vst.msk [vmem:[%s5] sm:$0xff] %vm726, %v722
    %728 = vst.msk [vmem:[%s5 + $0x8] sm:$0xff] %vm726, %v723
    %729 = vst.msk [vmem:[%s5 + $0x18] sm:$0xff] %vm726, %v724
    %730 = vst.msk [vmem:[%s5 + $0x20] sm:$0xff] %vm726, %v725
    %vm731 = vcmask 253952
    %732 = vst.msk [vmem:[%s5 + $0x10] sm:$0x1] %vm731, %v721
    %733 = vst.msk [vmem:[%s5 + $0x28] sm:$0x1] %vm731, %v721
    // Predicated region
    $region34: #{tpu_custom_call.1} parent=1 // pred_check
      _
    $region35: #{tpu_custom_call.1} parent=1 // pred_check_branch
      %735 = sbr.rel (0) target = $region37
    $region36: #{tpu_custom_call.1} parent=1 // pred_region
      _
    $region37: #{tpu_custom_call.1} parent=1 // pred_fallthru
      _
    // Predicated region
    $region38: #{tpu_custom_call.1} parent=1 // pred_check
      _
    $region39: #{tpu_custom_call.1} parent=1 // pred_check_branch
      %737 = sbr.rel (0) target = $region41
    $region40: #{tpu_custom_call.1} parent=1 // pred_region
      _
    $region41: #{tpu_custom_call.1} parent=1 // pred_fallthru
      _
    %738 = vsyncpa [#allocation3], 1
    %739 = vsyncpa [#allocation5], 1

</llo_original>
